<compile_context>
chip_gen: v7x
topology: tpu7x:2x2x1
jax: 0.10.0
libtpu: 0.0.40
codegen_flags: <defaults>
</compile_context>

<pallas_src>
import functools
import math

import jax
import jax.numpy as jnp
from jax.experimental import pallas as pl
from jax.experimental.pallas import tpu as pltpu

_MASK_FILL = -1000000000.0  # plain Python float -> inlined literal, not a captured const


def _sdpa_kernel(q_ref, k_ref, o_ref, *, scale, flat):
    # q:(Gt,Lq,Dk)  k:(Gt,Lk,Dk) -> scores:(Gt,Lq,Lk)
    q = q_ref[...] * scale                       # scale the smaller operand (Lq*Dk)
    s = jnp.einsum("gqd,gkd->gqk", q, k_ref[...],
                   preferred_element_type=jnp.float32)
    if flat:
        gt, lq, lk = s.shape
        o_ref[...] = s.reshape(gt, lq * lk)      # lane-dense slab (only when Lk < 128)
    else:
        o_ref[...] = s


def _sdpa_masked_kernel(q_ref, k_ref, m_ref, o_ref, *, scale, flat):
    q = q_ref[...] * scale
    s = jnp.einsum("gqd,gkd->gqk", q, k_ref[...],
                   preferred_element_type=jnp.float32)
    s = jnp.where(m_ref[...] != 0, _MASK_FILL, s)   # masked_fill_ fused in VMEM
    if flat:
        gt, lq, lk = s.shape
        o_ref[...] = s.reshape(gt, lq * lk)
    else:
        o_ref[...] = s


def _choose_group_tile(g, bytes_per_group, target_bytes):
    """Largest divisor of g whose block fits in target_bytes (per pipeline buffer)."""
    if g * bytes_per_group <= target_bytes:
        return g
    for gt in range(g - 1, 0, -1):
        if g % gt == 0 and gt * bytes_per_group <= target_bytes:
            return gt
    return 1


def scaled_dot_product_attention(Q, K, attn_mask=None, d_k=None, group_tile=None):
    """Pallas port of ScaledDotProductAttention.forward.

    Q: (B, H, Lq, Dk), K: (B, H, Lk, Dk),
    attn_mask: bool/int array broadcastable to (B, H, Lq, Lk), or None.
    Returns the (masked) attention scores, shape (B, H, Lq, Lk), float32.
    """
    Q = jnp.asarray(Q, jnp.float32)
    K = jnp.asarray(K, jnp.float32)
    Bz, H, Lq, Dk = Q.shape
    Lk = K.shape[2]
    if d_k is None:
        d_k = Dk
    G = Bz * H
    scale = float(1.0 / math.sqrt(d_k))

    # Leading-dim reshapes only (no data movement): fold batch & heads together.
    q = Q.reshape(G, Lq, Dk)
    k = K.reshape(G, Lk, Dk)

    masked = attn_mask is not None
    if masked:
        # Keep the mask int8 (4x less HBM traffic than the previous f32 mask).
        # TODO(synk): for (B,1,Lq,Lk) masks, reuse per head via the mask index_map
        # instead of broadcasting across heads (saves another Hx of mask bytes).
        m = jnp.asarray(attn_mask).astype(jnp.int8)
        m = jnp.broadcast_to(m, (Bz, H, Lq, Lk)).reshape(G, Lq, Lk)

    # Size the G-tile so one block (q + k + mask + out) is ~<=1 MiB; with
    # double-buffering this stays far under the scoped VMEM limit on all chips.
    bytes_per_group = 4 * (Lq * Dk + Lk * Dk + Lq * Lk)   # f32 q, k, scores
    if masked:
        bytes_per_group += Lq * Lk                        # int8 mask
    if group_tile is None:
        Gt = _choose_group_tile(G, bytes_per_group, target_bytes=1 << 20)
    else:
        Gt = int(group_tile)
        assert G % Gt == 0, (G, Gt)

    # Lane-dense flat output only when the natural last dim is narrow (<128 lanes)
    # and the flat block respects the (8,128) sublane constraint.
    flat = (Lk < 128) and (Gt == G or Gt % 8 == 0)

    grid = (G // Gt,)
    in_specs = [pl.BlockSpec((Gt, Lq, Dk), lambda g: (g, 0, 0)),
                pl.BlockSpec((Gt, Lk, Dk), lambda g: (g, 0, 0))]
    if masked:
        in_specs.append(pl.BlockSpec((Gt, Lq, Lk), lambda g: (g, 0, 0)))

    if flat:
        out_shape = jax.ShapeDtypeStruct((G, Lq * Lk), jnp.float32)
        out_spec = pl.BlockSpec((Gt, Lq * Lk), lambda g: (g, 0))
    else:
        out_shape = jax.ShapeDtypeStruct((G, Lq, Lk), jnp.float32)
        out_spec = pl.BlockSpec((Gt, Lq, Lk), lambda g: (g, 0, 0))

    params = pltpu.CompilerParams(
        dimension_semantics=("parallel",),       # shard G across TCs on v7x
        vmem_limit_bytes=32 * 1024 * 1024)       # explicit: safe on v7x's 64 MiB VMEM

    kernel = functools.partial(
        _sdpa_masked_kernel if masked else _sdpa_kernel, scale=scale, flat=flat)
    args = (q, k, m) if masked else (q, k)

    out = pl.pallas_call(
        kernel,
        grid=grid,
        out_shape=out_shape,
        in_specs=in_specs,
        out_specs=out_spec,
        compiler_params=params,
    )(*args)

    return out.reshape(Bz, H, Lq, Lk)


class ScaledDotProductAttention:
    """Mirrors the PyTorch module's interface."""

    def __init__(self, d_k):
        self.d_k = d_k

    def __call__(self, Q, K, attn_mask):
        return scaled_dot_product_attention(Q, K, attn_mask, d_k=self.d_k)


if __name__ == "__main__":
    key = jax.random.PRNGKey(0)
    kq, kk, km = jax.random.split(key, 3)
    B, H, L, DK = 2, 4, 16, 16

    Q = jax.random.normal(kq, (B, H, L, DK), dtype=jnp.float32)
    K = jax.random.normal(kk, (B, H, L, DK), dtype=jnp.float32)
    attn_mask = jax.random.bernoulli(km, 0.25, (B, H, L, L))   # bool mask

    module = ScaledDotProductAttention(DK)

    ref = jnp.matmul(Q, jnp.swapaxes(K, -1, -2)) / math.sqrt(DK)
    ref_masked = jnp.where(attn_mask, _MASK_FILL, ref)

    # --- masked path ---
    fwd = jax.jit(lambda q, k, m: module(q, k, m))
    out = jax.block_until_ready(fwd(Q, K, attn_mask))
    assert out.shape == (B, H, L, L), out.shape
    assert bool(jnp.allclose(out, ref_masked, atol=1e-4, rtol=1e-4)), \
        float(jnp.max(jnp.abs(out - ref_masked)))

    # --- attn_mask=None path ---
    fwd_nomask = jax.jit(lambda q, k: module(q, k, None))
    out2 = jax.block_until_ready(fwd_nomask(Q, K))
    assert bool(jnp.allclose(out2, ref, atol=1e-4, rtol=1e-4))
    assert bool(jnp.all(jnp.isfinite(out2)))

    # --- multi-step grid path (force a smaller G-tile to exercise pipelining) ---
    fwd_tiled = jax.jit(functools.partial(
        scaled_dot_product_attention, d_k=DK, group_tile=2))
    out3 = jax.block_until_ready(fwd_tiled(Q, K, attn_mask))
    assert bool(jnp.allclose(out3, ref_masked, atol=1e-4, rtol=1e-4))

    print("KERNEL_OK")
</pallas_src>

<mosaic_0001>
module attributes {stable_mosaic.version = 11 : i64} {
  func.func @_sdpa_masked_kernel(%arg0: i32, %arg1: memref<8x16x16xf32, #tpu.memory_space<vmem>>, %arg2: memref<8x16x16xf32, #tpu.memory_space<vmem>>, %arg3: memref<8x16x16xi8, #tpu.memory_space<vmem>>, %arg4: memref<8x256xf32, #tpu.memory_space<vmem>>) attributes {dimension_semantics = [#tpu.dimension_semantics<parallel>], iteration_bounds = array<i64: 1>, scalar_prefetch = 0 : i64, scratch_operands = 0 : i64, tpu.core_type = #tpu.core_type<tc>, window_params = [{transform_indices = @transform_0, window_bounds = array<i64: 8, 16, 16>}, {transform_indices = @transform_1, window_bounds = array<i64: 8, 16, 16>}, {transform_indices = @transform_2, window_bounds = array<i64: 8, 16, 16>}, {transform_indices = @transform_3, window_bounds = array<i64: 8, 256>}]} {
    %c0 = arith.constant 0 : index
    %c0_0 = arith.constant 0 : index
    %c0_1 = arith.constant 0 : index
    %0 = vector.load %arg1[%c0, %c0_0, %c0_1] : memref<8x16x16xf32, #tpu.memory_space<vmem>>, vector<8x16x16xf32>
    %cst = arith.constant 2.500000e-01 : f32
    %1 = vector.broadcast %cst : f32 to vector<8x16x16xf32>
    %2 = arith.mulf %0, %1 : vector<8x16x16xf32>
    %c0_2 = arith.constant 0 : index
    %c0_3 = arith.constant 0 : index
    %c0_4 = arith.constant 0 : index
    %3 = vector.load %arg2[%c0_2, %c0_3, %c0_4] : memref<8x16x16xf32, #tpu.memory_space<vmem>>, vector<8x16x16xf32>
    "tpu.trace_start"() <{level = 10 : i32, message = "gqd,gkd->gqk"}> : () -> ()
    %cst_5 = arith.constant dense<0.000000e+00> : vector<8x16x16xf32>
    %4 = tpu.matmul %2, %3, %cst_5 {dimension_numbers = #tpu.dot_dimension_numbers<[2], [2], [1], [1], [0, 0, 0, 1, 1, 1], [0], [0]>} : vector<8x16x16xf32>, vector<8x16x16xf32>, vector<8x16x16xf32> -> vector<8x16x16xf32>
    "tpu.trace_stop"() : () -> ()
    %c0_6 = arith.constant 0 : index
    %c0_7 = arith.constant 0 : index
    %c0_8 = arith.constant 0 : index
    %5 = vector.load %arg3[%c0_6, %c0_7, %c0_8] : memref<8x16x16xi8, #tpu.memory_space<vmem>>, vector<8x16x16xi8>
    %c0_i8 = arith.constant 0 : i8
    %6 = vector.broadcast %c0_i8 : i8 to vector<8x16x16xi8>
    %7 = arith.cmpi ne, %5, %6 : vector<8x16x16xi8>
    %cst_9 = arith.constant -1.000000e+09 : f32
    %8 = vector.broadcast %cst_9 : f32 to vector<8x16x16xf32>
    %9 = arith.select %7, %8, %4 : vector<8x16x16xi1>, vector<8x16x16xf32>
    %10 = vector.shape_cast %9 : vector<8x16x16xf32> to vector<8x256xf32>
    %c0_10 = arith.constant 0 : index
    %c0_11 = arith.constant 0 : index
    %11 = vector.load %arg4[%c0_10, %c0_11] : memref<8x256xf32, #tpu.memory_space<vmem>>, vector<8x256xf32>
    tpu.vector_store %arg4[%c0_10, %c0_11], %10 {strides = array<i32>} : memref<8x256xf32, #tpu.memory_space<vmem>>, vector<8x256xf32>,
    return
  }
  func.func @transform_0(%arg0: i32) -> (i32, i32, i32) {
    %c0_i32 = arith.constant 0 : i32
    %c0_i32_0 = arith.constant 0 : i32
    %c0_i32_1 = arith.constant 0 : i32
    return %arg0, %c0_i32, %c0_i32_0 : i32, i32, i32
  }
  func.func @transform_1(%arg0: i32) -> (i32, i32, i32) {
    %c0_i32 = arith.constant 0 : i32
    %c0_i32_0 = arith.constant 0 : i32
    %c0_i32_1 = arith.constant 0 : i32
    return %arg0, %c0_i32, %c0_i32_0 : i32, i32, i32
  }
  func.func @transform_2(%arg0: i32) -> (i32, i32, i32) {
    %c0_i32 = arith.constant 0 : i32
    %c0_i32_0 = arith.constant 0 : i32
    %c0_i32_1 = arith.constant 0 : i32
    return %arg0, %c0_i32, %c0_i32_0 : i32, i32, i32
  }
  func.func @transform_3(%arg0: i32) -> (i32, i32) {
    %c0_i32 = arith.constant 0 : i32
    %c0_i32_0 = arith.constant 0 : i32
    return %arg0, %c0_i32 : i32, i32
  }
}

</mosaic_0001>

<llo_original>
// kernel: _lambda_.1
$region0: #{_lambda_.1}
  #allocation0 [shape = 'u32[]', space=smem, size = 0x4, offset = 0x4, fixed_abs, tag = 'smem constant byte address 0x4 - core index']
  #allocation1 [shape = 'u32[144,128]{1,0:T(1,128)}', space=vmem, size = 0x12000, scoped, tag = 'internal scratch']
  %s0 = inlined_call_operand.hbm [shape: f32[8,16,16], index: 0, kind: input, shape index: {}]
  %s1 = inlined_call_operand.hbm [shape: f32[8,16,16], index: 1, kind: input, shape index: {}]
  %s2 = inlined_call_operand.vmem [shape: s8[8,16,16], index: 2, kind: input, shape index: {}]
  %s3 = inlined_call_operand.vmem [shape: f32[8,256], index: 3, kind: output, shape index: {}]
  %s4 = sld [smem:[#allocation0]]
  $region30: #{_lambda_.1} parent=0
    _
  %s6 = ssub.s32 1, %s4
  %s7 = scalar_select 0, %s6, %s4
  $region1: #{_lambda_.1} parent=0
    #allocation2 [shape = 'u8[65536]{0}', space=vmem, size = 0x10000, scoped, tag = 'input window, operand 0, single buffered']
    #allocation3 [shape = 's32[1]{0}', space=sflag, size = 0x4, scoped, tag = 'scoped memory for _lambda_.1']
    #allocation4 [shape = 'u8[65536]{0}', space=vmem, size = 0x10000, scoped, tag = 'input window, operand 1, single buffered']
    #allocation5 [shape = 's32[1]{0}', space=sflag, size = 0x4, scoped, tag = 'scoped memory for _lambda_.1']
    %8 = vsyncpa [#allocation3], 0
    %9 = vsyncpa [#allocation5], 0
    // Predicated region
    $region2: #{_lambda_.1} parent=1 // pred_check
      _
    $region3: #{_lambda_.1} parent=1 // pred_check_branch
      %11 = sbr.rel (0) target = $region5
    $region4: #{_lambda_.1} parent=1 // pred_region
      %s13 = ssub.s32 2048, 2048
      %14 = vsyncadd [#allocation3], %s13
      %s15 = sshll.u32 [#allocation2], 4
      %s16 = int_to_ptr.vmem [resolvable:$true] %s15
      %21 = dma.hbm_to_vmem [thread:$0]  %s0, 2048, %s16, [#allocation3], 128, 128, 8
    $region5: #{_lambda_.1} parent=1 // pred_fallthru
      _
    // Predicated region
    $region6: #{_lambda_.1} parent=1 // pred_check
      _
    $region7: #{_lambda_.1} parent=1 // pred_check_branch
      %23 = sbr.rel (0) target = $region9
    $region8: #{_lambda_.1} parent=1 // pred_region
      %s25 = ssub.s32 2048, 2048
      %26 = vsyncadd [#allocation5], %s25
      %s27 = sshll.u32 [#allocation4], 4
      %s28 = int_to_ptr.vmem [resolvable:$true] %s27
      %33 = dma.hbm_to_vmem [thread:$0]  %s1, 2048, %s28, [#allocation5], 128, 128, 8
    $region9: #{_lambda_.1} parent=1 // pred_fallthru
      _
    // Predicated region
    $region10: #{_lambda_.1} parent=1 // pred_check
      _
    $region11: #{_lambda_.1} parent=1 // pred_check_branch
      %35 = sbr.rel (0) target = $region13
    $region12: #{_lambda_.1} parent=1 // pred_region
      _
    $region13: #{_lambda_.1} parent=1 // pred_fallthru
      _
    // Predicated region
    $region14: #{_lambda_.1} parent=1 // pred_check
      _
    $region15: #{_lambda_.1} parent=1 // pred_check_branch
      %37 = sbr.rel (0) target = $region17
    $region16: #{_lambda_.1} parent=1 // pred_region
      %38 = dma.done [#allocation3], 2048
    $region17: #{_lambda_.1} parent=1 // pred_fallthru
      _
    // Predicated region
    $region18: #{_lambda_.1} parent=1 // pred_check
      _
    $region19: #{_lambda_.1} parent=1 // pred_check_branch
      %40 = sbr.rel (0) target = $region21
    $region20: #{_lambda_.1} parent=1 // pred_region
      %41 = dma.done [#allocation5], 2048
    $region21: #{_lambda_.1} parent=1 // pred_fallthru
      _
    %v44 = vld [vmem:[#allocation2] sm:$0xff]
    %v45 = vld [vmem:[#allocation2 + $0x8] sm:$0xff]
    %v46 = vld [vmem:[#allocation2 + $0x10] sm:$0xff]
    %v47 = vld [vmem:[#allocation2 + $0x18] sm:$0xff]
    %v48 = vld [vmem:[#allocation2 + $0x20] sm:$0xff]
    %v49 = vld [vmem:[#allocation2 + $0x28] sm:$0xff]
    %v50 = vld [vmem:[#allocation2 + $0x30] sm:$0xff]
    %v51 = vld [vmem:[#allocation2 + $0x38] sm:$0xff]
    %v52 = vld [vmem:[#allocation2 + $0x40] sm:$0xff]
    %v53 = vld [vmem:[#allocation2 + $0x48] sm:$0xff]
    %v54 = vld [vmem:[#allocation2 + $0x50] sm:$0xff]
    %v55 = vld [vmem:[#allocation2 + $0x58] sm:$0xff]
    %v56 = vld [vmem:[#allocation2 + $0x60] sm:$0xff]
    %v57 = vld [vmem:[#allocation2 + $0x68] sm:$0xff]
    %v58 = vld [vmem:[#allocation2 + $0x70] sm:$0xff]
    %v59 = vld [vmem:[#allocation2 + $0x78] sm:$0xff]
    %v60 = vmul.f32 %v44, 0.25
    %v61 = vmul.f32 %v45, 0.25
    %v62 = vmul.f32 %v46, 0.25
    %v63 = vmul.f32 %v47, 0.25
    %v64 = vmul.f32 %v48, 0.25
    %v65 = vmul.f32 %v49, 0.25
    %v66 = vmul.f32 %v50, 0.25
    %v67 = vmul.f32 %v51, 0.25
    %v68 = vmul.f32 %v52, 0.25
    %v69 = vmul.f32 %v53, 0.25
    %v70 = vmul.f32 %v54, 0.25
    %v71 = vmul.f32 %v55, 0.25
    %v72 = vmul.f32 %v56, 0.25
    %v73 = vmul.f32 %v57, 0.25
    %v74 = vmul.f32 %v58, 0.25
    %v75 = vmul.f32 %v59, 0.25
    %v76 = vld [vmem:[#allocation4] sm:$0xff]
    %v77 = vld [vmem:[#allocation4 + $0x8] sm:$0xff]
    %v78 = vld [vmem:[#allocation4 + $0x10] sm:$0xff]
    %v79 = vld [vmem:[#allocation4 + $0x18] sm:$0xff]
    %v80 = vld [vmem:[#allocation4 + $0x20] sm:$0xff]
    %v81 = vld [vmem:[#allocation4 + $0x28] sm:$0xff]
    %v82 = vld [vmem:[#allocation4 + $0x30] sm:$0xff]
    %v83 = vld [vmem:[#allocation4 + $0x38] sm:$0xff]
    %v84 = vld [vmem:[#allocation4 + $0x40] sm:$0xff]
    %v85 = vld [vmem:[#allocation4 + $0x48] sm:$0xff]
    %v86 = vld [vmem:[#allocation4 + $0x50] sm:$0xff]
    %v87 = vld [vmem:[#allocation4 + $0x58] sm:$0xff]
    %v88 = vld [vmem:[#allocation4 + $0x60] sm:$0xff]
    %v89 = vld [vmem:[#allocation4 + $0x68] sm:$0xff]
    %v90 = vld [vmem:[#allocation4 + $0x70] sm:$0xff]
    %v91 = vld [vmem:[#allocation4 + $0x78] sm:$0xff]
    %vm92 = vcmask 130048
    %v94 = vsel %vm92, %v60, 0
    %v97 = vsel %vm92, %v61, 0
    %v100 = vsel %vm92, %v76, 0
    %v103 = vsel %vm92, %v77, 0
    %105 = vmatprep.subr.mxu0 0.0
    %106 = vmatpush1.xpose.msra.mxu0 %v100
    %107 = vmatprep.subr.mxu0 0.0
    %108 = vmatpush1.xpose.msra.mxu0 %v103
    %109 = vmatprep.subr.mxu0 0.0
    %110 = vmatpush1.xpose.msra.mxu0 0.0
    %111 = vmatprep.subr.mxu0 0.0
    %112 = vmatpush1.xpose.msra.mxu0 0.0
    %113 = vmatprep.subr.mxu0 0.0
    %114 = vmatpush1.xpose.msra.mxu0 0.0
    %115 = vmatprep.subr.mxu0 0.0
    %116 = vmatpush1.xpose.msra.mxu0 0.0
    %117 = vmatprep.subr.mxu0 0.0
    %118 = vmatpush1.xpose.msra.mxu0 0.0
    %119 = vmatprep.subr.mxu0 0.0
    %120 = vmatpush1.xpose.msra.mxu0 0.0
    %121 = vmatprep.subr.mxu0 0.0
    %122 = vmatpush1.xpose.msra.mxu0 0.0
    %123 = vmatprep.subr.mxu0 0.0
    %124 = vmatpush1.xpose.msra.mxu0 0.0
    %125 = vmatprep.subr.mxu0 0.0
    %126 = vmatpush1.xpose.msra.mxu0 0.0
    %127 = vmatprep.subr.mxu0 0.0
    %128 = vmatpush1.xpose.msra.mxu0 0.0
    %129 = vmatprep.subr.mxu0 0.0
    %130 = vmatpush1.xpose.msra.mxu0 0.0
    %131 = vmatprep.subr.mxu0 0.0
    %132 = vmatpush1.xpose.msra.mxu0 0.0
    %133 = vmatprep.subr.mxu0 0.0
    %134 = vmatpush1.xpose.msra.mxu0 0.0
    %135 = vmatprep.subr.mxu0 0.0
    %136 = vmatpush1.xpose.msra.mxu0 0.0
    %137 = vmatprep.subr.mxu0 0.0
    %138 = vmatpush1.xpose.msra.mxu0 0.0
    %139 = vmatprep.subr.mxu0 0.0
    %140 = vmatpush1.xpose.msra.mxu0 0.0
    %141 = vmatprep.subr.mxu0 0.0
    %142 = vmatpush1.xpose.msra.mxu0 0.0
    %143 = vmatprep.subr.mxu0 0.0
    %144 = vmatpush1.xpose.msra.mxu0 0.0
    %145 = vmatprep.subr.mxu0 0.0
    %146 = vmatpush1.xpose.msra.mxu0 0.0
    %147 = vmatprep.subr.mxu0 0.0
    %148 = vmatpush1.xpose.msra.mxu0 0.0
    %149 = vmatprep.subr.mxu0 0.0
    %150 = vmatpush1.xpose.msra.mxu0 0.0
    %151 = vmatprep.subr.mxu0 0.0
    %152 = vmatpush1.xpose.msra.mxu0 0.0
    %153 = vmatprep.subr.mxu0 0.0
    %154 = vmatpush1.xpose.msra.mxu0 0.0
    %155 = vmatprep.subr.mxu0 0.0
    %156 = vmatpush1.xpose.msra.mxu0 0.0
    %157 = vmatprep.subr.mxu0 0.0
    %158 = vmatpush1.xpose.msra.mxu0 0.0
    %159 = vmatprep.subr.mxu0 0.0
    %160 = vmatpush1.xpose.msra.mxu0 0.0
    %161 = vmatprep.subr.mxu0 0.0
    %162 = vmatpush1.xpose.msra.mxu0 0.0
    %163 = vmatprep.subr.mxu0 0.0
    %164 = vmatpush1.xpose.msra.mxu0 0.0
    %165 = vmatprep.subr.mxu0 0.0
    %166 = vmatpush1.xpose.msra.mxu0 0.0
    %167 = vmatprep.subr.mxu0 0.0
    %168 = vmatpush1.xpose.msra.mxu0 0.0
    %169 = vmatprep.mubr.f32.mxu0 0.0
    %170 = vmatmul.mubr.f32.gmra.mrb[0].mxu0 %v94
    %v171 = vpop.f32.mrb[0].mxu0
    %v172 = vadd.f32 0.0, %v171
    %v173 = vpop.f32.mrb[0].mxu0
    %174 = vmatprep.mubr.f32.mxu0 0.0
    %175 = vmatmul.mubr.f32.gmra.mrb[0].mxu0 %v97
    %v176 = vpop.f32.mrb[0].mxu0
    %v177 = vadd.f32 0.0, %v176
    %v178 = vpop.f32.mrb[0].mxu0
    %179 = vdwg.mxu0
    %v181 = vsel %vm92, %v62, 0
    %v184 = vsel %vm92, %v63, 0
    %v187 = vsel %vm92, %v78, 0
    %v190 = vsel %vm92, %v79, 0
    %192 = vmatprep.subr.mxu0 0.0
    %193 = vmatpush1.xpose.msra.mxu0 %v187
    %194 = vmatprep.subr.mxu0 0.0
    %195 = vmatpush1.xpose.msra.mxu0 %v190
    %196 = vmatprep.subr.mxu0 0.0
    %197 = vmatpush1.xpose.msra.mxu0 0.0
    %198 = vmatprep.subr.mxu0 0.0
    %199 = vmatpush1.xpose.msra.mxu0 0.0
    %200 = vmatprep.subr.mxu0 0.0
    %201 = vmatpush1.xpose.msra.mxu0 0.0
    %202 = vmatprep.subr.mxu0 0.0
    %203 = vmatpush1.xpose.msra.mxu0 0.0
    %204 = vmatprep.subr.mxu0 0.0
    %205 = vmatpush1.xpose.msra.mxu0 0.0
    %206 = vmatprep.subr.mxu0 0.0
    %207 = vmatpush1.xpose.msra.mxu0 0.0
    %208 = vmatprep.subr.mxu0 0.0
    %209 = vmatpush1.xpose.msra.mxu0 0.0
    %210 = vmatprep.subr.mxu0 0.0
    %211 = vmatpush1.xpose.msra.mxu0 0.0
    %212 = vmatprep.subr.mxu0 0.0
    %213 = vmatpush1.xpose.msra.mxu0 0.0
    %214 = vmatprep.subr.mxu0 0.0
    %215 = vmatpush1.xpose.msra.mxu0 0.0
    %216 = vmatprep.subr.mxu0 0.0
    %217 = vmatpush1.xpose.msra.mxu0 0.0
    %218 = vmatprep.subr.mxu0 0.0
    %219 = vmatpush1.xpose.msra.mxu0 0.0
    %220 = vmatprep.subr.mxu0 0.0
    %221 = vmatpush1.xpose.msra.mxu0 0.0
    %222 = vmatprep.subr.mxu0 0.0
    %223 = vmatpush1.xpose.msra.mxu0 0.0
    %224 = vmatprep.subr.mxu0 0.0
    %225 = vmatpush1.xpose.msra.mxu0 0.0
    %226 = vmatprep.subr.mxu0 0.0
    %227 = vmatpush1.xpose.msra.mxu0 0.0
    %228 = vmatprep.subr.mxu0 0.0
    %229 = vmatpush1.xpose.msra.mxu0 0.0
    %230 = vmatprep.subr.mxu0 0.0
    %231 = vmatpush1.xpose.msra.mxu0 0.0
    %232 = vmatprep.subr.mxu0 0.0
    %233 = vmatpush1.xpose.msra.mxu0 0.0
    %234 = vmatprep.subr.mxu0 0.0
    %235 = vmatpush1.xpose.msra.mxu0 0.0
    %236 = vmatprep.subr.mxu0 0.0
    %237 = vmatpush1.xpose.msra.mxu0 0.0
    %238 = vmatprep.subr.mxu0 0.0
    %239 = vmatpush1.xpose.msra.mxu0 0.0
    %240 = vmatprep.subr.mxu0 0.0
    %241 = vmatpush1.xpose.msra.mxu0 0.0
    %242 = vmatprep.subr.mxu0 0.0
    %243 = vmatpush1.xpose.msra.mxu0 0.0
    %244 = vmatprep.subr.mxu0 0.0
    %245 = vmatpush1.xpose.msra.mxu0 0.0
    %246 = vmatprep.subr.mxu0 0.0
    %247 = vmatpush1.xpose.msra.mxu0 0.0
    %248 = vmatprep.subr.mxu0 0.0
    %249 = vmatpush1.xpose.msra.mxu0 0.0
    %250 = vmatprep.subr.mxu0 0.0
    %251 = vmatpush1.xpose.msra.mxu0 0.0
    %252 = vmatprep.subr.mxu0 0.0
    %253 = vmatpush1.xpose.msra.mxu0 0.0
    %254 = vmatprep.subr.mxu0 0.0
    %255 = vmatpush1.xpose.msra.mxu0 0.0
    %256 = vmatprep.mubr.f32.mxu0 0.0
    %257 = vmatmul.mubr.f32.gmra.mrb[0].mxu0 %v181
    %v258 = vpop.f32.mrb[0].mxu0
    %v259 = vadd.f32 0.0, %v258
    %v260 = vpop.f32.mrb[0].mxu0
    %261 = vmatprep.mubr.f32.mxu0 0.0
    %262 = vmatmul.mubr.f32.gmra.mrb[0].mxu0 %v184
    %v263 = vpop.f32.mrb[0].mxu0
    %v264 = vadd.f32 0.0, %v263
    %v265 = vpop.f32.mrb[0].mxu0
    %266 = vdwg.mxu0
    %v268 = vsel %vm92, %v64, 0
    %v271 = vsel %vm92, %v65, 0
    %v274 = vsel %vm92, %v80, 0
    %v277 = vsel %vm92, %v81, 0
    %279 = vmatprep.subr.mxu0 0.0
    %280 = vmatpush1.xpose.msra.mxu0 %v274
    %281 = vmatprep.subr.mxu0 0.0
    %282 = vmatpush1.xpose.msra.mxu0 %v277
    %283 = vmatprep.subr.mxu0 0.0
    %284 = vmatpush1.xpose.msra.mxu0 0.0
    %285 = vmatprep.subr.mxu0 0.0
    %286 = vmatpush1.xpose.msra.mxu0 0.0
    %287 = vmatprep.subr.mxu0 0.0
    %288 = vmatpush1.xpose.msra.mxu0 0.0
    %289 = vmatprep.subr.mxu0 0.0
    %290 = vmatpush1.xpose.msra.mxu0 0.0
    %291 = vmatprep.subr.mxu0 0.0
    %292 = vmatpush1.xpose.msra.mxu0 0.0
    %293 = vmatprep.subr.mxu0 0.0
    %294 = vmatpush1.xpose.msra.mxu0 0.0
    %295 = vmatprep.subr.mxu0 0.0
    %296 = vmatpush1.xpose.msra.mxu0 0.0
    %297 = vmatprep.subr.mxu0 0.0
    %298 = vmatpush1.xpose.msra.mxu0 0.0
    %299 = vmatprep.subr.mxu0 0.0
    %300 = vmatpush1.xpose.msra.mxu0 0.0
    %301 = vmatprep.subr.mxu0 0.0
    %302 = vmatpush1.xpose.msra.mxu0 0.0
    %303 = vmatprep.subr.mxu0 0.0
    %304 = vmatpush1.xpose.msra.mxu0 0.0
    %305 = vmatprep.subr.mxu0 0.0
    %306 = vmatpush1.xpose.msra.mxu0 0.0
    %307 = vmatprep.subr.mxu0 0.0
    %308 = vmatpush1.xpose.msra.mxu0 0.0
    %309 = vmatprep.subr.mxu0 0.0
    %310 = vmatpush1.xpose.msra.mxu0 0.0
    %311 = vmatprep.subr.mxu0 0.0
    %312 = vmatpush1.xpose.msra.mxu0 0.0
    %313 = vmatprep.subr.mxu0 0.0
    %314 = vmatpush1.xpose.msra.mxu0 0.0
    %315 = vmatprep.subr.mxu0 0.0
    %316 = vmatpush1.xpose.msra.mxu0 0.0
    %317 = vmatprep.subr.mxu0 0.0
    %318 = vmatpush1.xpose.msra.mxu0 0.0
    %319 = vmatprep.subr.mxu0 0.0
    %320 = vmatpush1.xpose.msra.mxu0 0.0
    %321 = vmatprep.subr.mxu0 0.0
    %322 = vmatpush1.xpose.msra.mxu0 0.0
    %323 = vmatprep.subr.mxu0 0.0
    %324 = vmatpush1.xpose.msra.mxu0 0.0
    %325 = vmatprep.subr.mxu0 0.0
    %326 = vmatpush1.xpose.msra.mxu0 0.0
    %327 = vmatprep.subr.mxu0 0.0
    %328 = vmatpush1.xpose.msra.mxu0 0.0
    %329 = vmatprep.subr.mxu0 0.0
    %330 = vmatpush1.xpose.msra.mxu0 0.0
    %331 = vmatprep.subr.mxu0 0.0
    %332 = vmatpush1.xpose.msra.mxu0 0.0
    %333 = vmatprep.subr.mxu0 0.0
    %334 = vmatpush1.xpose.msra.mxu0 0.0
    %335 = vmatprep.subr.mxu0 0.0
    %336 = vmatpush1.xpose.msra.mxu0 0.0
    %337 = vmatprep.subr.mxu0 0.0
    %338 = vmatpush1.xpose.msra.mxu0 0.0
    %339 = vmatprep.subr.mxu0 0.0
    %340 = vmatpush1.xpose.msra.mxu0 0.0
    %341 = vmatprep.subr.mxu0 0.0
    %342 = vmatpush1.xpose.msra.mxu0 0.0
    %343 = vmatprep.mubr.f32.mxu0 0.0
    %344 = vmatmul.mubr.f32.gmra.mrb[0].mxu0 %v268
    %v345 = vpop.f32.mrb[0].mxu0
    %v346 = vadd.f32 0.0, %v345
    %v347 = vpop.f32.mrb[0].mxu0
    %348 = vmatprep.mubr.f32.mxu0 0.0
    %349 = vmatmul.mubr.f32.gmra.mrb[0].mxu0 %v271
    %v350 = vpop.f32.mrb[0].mxu0
    %v351 = vadd.f32 0.0, %v350
    %v352 = vpop.f32.mrb[0].mxu0
    %353 = vdwg.mxu0
    %v355 = vsel %vm92, %v66, 0
    %v358 = vsel %vm92, %v67, 0
    %v361 = vsel %vm92, %v82, 0
    %v364 = vsel %vm92, %v83, 0
    %366 = vmatprep.subr.mxu0 0.0
    %367 = vmatpush1.xpose.msra.mxu0 %v361
    %368 = vmatprep.subr.mxu0 0.0
    %369 = vmatpush1.xpose.msra.mxu0 %v364
    %370 = vmatprep.subr.mxu0 0.0
    %371 = vmatpush1.xpose.msra.mxu0 0.0
    %372 = vmatprep.subr.mxu0 0.0
    %373 = vmatpush1.xpose.msra.mxu0 0.0
    %374 = vmatprep.subr.mxu0 0.0
    %375 = vmatpush1.xpose.msra.mxu0 0.0
    %376 = vmatprep.subr.mxu0 0.0
    %377 = vmatpush1.xpose.msra.mxu0 0.0
    %378 = vmatprep.subr.mxu0 0.0
    %379 = vmatpush1.xpose.msra.mxu0 0.0
    %380 = vmatprep.subr.mxu0 0.0
    %381 = vmatpush1.xpose.msra.mxu0 0.0
    %382 = vmatprep.subr.mxu0 0.0
    %383 = vmatpush1.xpose.msra.mxu0 0.0
    %384 = vmatprep.subr.mxu0 0.0
    %385 = vmatpush1.xpose.msra.mxu0 0.0
    %386 = vmatprep.subr.mxu0 0.0
    %387 = vmatpush1.xpose.msra.mxu0 0.0
    %388 = vmatprep.subr.mxu0 0.0
    %389 = vmatpush1.xpose.msra.mxu0 0.0
    %390 = vmatprep.subr.mxu0 0.0
    %391 = vmatpush1.xpose.msra.mxu0 0.0
    %392 = vmatprep.subr.mxu0 0.0
    %393 = vmatpush1.xpose.msra.mxu0 0.0
    %394 = vmatprep.subr.mxu0 0.0
    %395 = vmatpush1.xpose.msra.mxu0 0.0
    %396 = vmatprep.subr.mxu0 0.0
    %397 = vmatpush1.xpose.msra.mxu0 0.0
    %398 = vmatprep.subr.mxu0 0.0
    %399 = vmatpush1.xpose.msra.mxu0 0.0
    %400 = vmatprep.subr.mxu0 0.0
    %401 = vmatpush1.xpose.msra.mxu0 0.0
    %402 = vmatprep.subr.mxu0 0.0
    %403 = vmatpush1.xpose.msra.mxu0 0.0
    %404 = vmatprep.subr.mxu0 0.0
    %405 = vmatpush1.xpose.msra.mxu0 0.0
    %406 = vmatprep.subr.mxu0 0.0
    %407 = vmatpush1.xpose.msra.mxu0 0.0
    %408 = vmatprep.subr.mxu0 0.0
    %409 = vmatpush1.xpose.msra.mxu0 0.0
    %410 = vmatprep.subr.mxu0 0.0
    %411 = vmatpush1.xpose.msra.mxu0 0.0
    %412 = vmatprep.subr.mxu0 0.0
    %413 = vmatpush1.xpose.msra.mxu0 0.0
    %414 = vmatprep.subr.mxu0 0.0
    %415 = vmatpush1.xpose.msra.mxu0 0.0
    %416 = vmatprep.subr.mxu0 0.0
    %417 = vmatpush1.xpose.msra.mxu0 0.0
    %418 = vmatprep.subr.mxu0 0.0
    %419 = vmatpush1.xpose.msra.mxu0 0.0
    %420 = vmatprep.subr.mxu0 0.0
    %421 = vmatpush1.xpose.msra.mxu0 0.0
    %422 = vmatprep.subr.mxu0 0.0
    %423 = vmatpush1.xpose.msra.mxu0 0.0
    %424 = vmatprep.subr.mxu0 0.0
    %425 = vmatpush1.xpose.msra.mxu0 0.0
    %426 = vmatprep.subr.mxu0 0.0
    %427 = vmatpush1.xpose.msra.mxu0 0.0
    %428 = vmatprep.subr.mxu0 0.0
    %429 = vmatpush1.xpose.msra.mxu0 0.0
    %430 = vmatprep.mubr.f32.mxu0 0.0
    %431 = vmatmul.mubr.f32.gmra.mrb[0].mxu0 %v355
    %v432 = vpop.f32.mrb[0].mxu0
    %v433 = vadd.f32 0.0, %v432
    %v434 = vpop.f32.mrb[0].mxu0
    %435 = vmatprep.mubr.f32.mxu0 0.0
    %436 = vmatmul.mubr.f32.gmra.mrb[0].mxu0 %v358
    %v437 = vpop.f32.mrb[0].mxu0
    %v438 = vadd.f32 0.0, %v437
    %v439 = vpop.f32.mrb[0].mxu0
    %440 = vdwg.mxu0
    %v442 = vsel %vm92, %v68, 0
    %v445 = vsel %vm92, %v69, 0
    %v448 = vsel %vm92, %v84, 0
    %v451 = vsel %vm92, %v85, 0
    %453 = vmatprep.subr.mxu0 0.0
    %454 = vmatpush1.xpose.msra.mxu0 %v448
    %455 = vmatprep.subr.mxu0 0.0
    %456 = vmatpush1.xpose.msra.mxu0 %v451
    %457 = vmatprep.subr.mxu0 0.0
    %458 = vmatpush1.xpose.msra.mxu0 0.0
    %459 = vmatprep.subr.mxu0 0.0
    %460 = vmatpush1.xpose.msra.mxu0 0.0
    %461 = vmatprep.subr.mxu0 0.0
    %462 = vmatpush1.xpose.msra.mxu0 0.0
    %463 = vmatprep.subr.mxu0 0.0
    %464 = vmatpush1.xpose.msra.mxu0 0.0
    %465 = vmatprep.subr.mxu0 0.0
    %466 = vmatpush1.xpose.msra.mxu0 0.0
    %467 = vmatprep.subr.mxu0 0.0
    %468 = vmatpush1.xpose.msra.mxu0 0.0
    %469 = vmatprep.subr.mxu0 0.0
    %470 = vmatpush1.xpose.msra.mxu0 0.0
    %471 = vmatprep.subr.mxu0 0.0
    %472 = vmatpush1.xpose.msra.mxu0 0.0
    %473 = vmatprep.subr.mxu0 0.0
    %474 = vmatpush1.xpose.msra.mxu0 0.0
    %475 = vmatprep.subr.mxu0 0.0
    %476 = vmatpush1.xpose.msra.mxu0 0.0
    %477 = vmatprep.subr.mxu0 0.0
    %478 = vmatpush1.xpose.msra.mxu0 0.0
    %479 = vmatprep.subr.mxu0 0.0
    %480 = vmatpush1.xpose.msra.mxu0 0.0
    %481 = vmatprep.subr.mxu0 0.0
    %482 = vmatpush1.xpose.msra.mxu0 0.0
    %483 = vmatprep.subr.mxu0 0.0
    %484 = vmatpush1.xpose.msra.mxu0 0.0
    %485 = vmatprep.subr.mxu0 0.0
    %486 = vmatpush1.xpose.msra.mxu0 0.0
    %487 = vmatprep.subr.mxu0 0.0
    %488 = vmatpush1.xpose.msra.mxu0 0.0
    %489 = vmatprep.subr.mxu0 0.0
    %490 = vmatpush1.xpose.msra.mxu0 0.0
    %491 = vmatprep.subr.mxu0 0.0
    %492 = vmatpush1.xpose.msra.mxu0 0.0
    %493 = vmatprep.subr.mxu0 0.0
    %494 = vmatpush1.xpose.msra.mxu0 0.0
    %495 = vmatprep.subr.mxu0 0.0
    %496 = vmatpush1.xpose.msra.mxu0 0.0
    %497 = vmatprep.subr.mxu0 0.0
    %498 = vmatpush1.xpose.msra.mxu0 0.0
    %499 = vmatprep.subr.mxu0 0.0
    %500 = vmatpush1.xpose.msra.mxu0 0.0
    %501 = vmatprep.subr.mxu0 0.0
    %502 = vmatpush1.xpose.msra.mxu0 0.0
    %503 = vmatprep.subr.mxu0 0.0
    %504 = vmatpush1.xpose.msra.mxu0 0.0
    %505 = vmatprep.subr.mxu0 0.0
    %506 = vmatpush1.xpose.msra.mxu0 0.0
    %507 = vmatprep.subr.mxu0 0.0
    %508 = vmatpush1.xpose.msra.mxu0 0.0
    %509 = vmatprep.subr.mxu0 0.0
    %510 = vmatpush1.xpose.msra.mxu0 0.0
    %511 = vmatprep.subr.mxu0 0.0
    %512 = vmatpush1.xpose.msra.mxu0 0.0
    %513 = vmatprep.subr.mxu0 0.0
    %514 = vmatpush1.xpose.msra.mxu0 0.0
    %515 = vmatprep.subr.mxu0 0.0
    %516 = vmatpush1.xpose.msra.mxu0 0.0
    %517 = vmatprep.mubr.f32.mxu0 0.0
    %518 = vmatmul.mubr.f32.gmra.mrb[0].mxu0 %v442
    %v519 = vpop.f32.mrb[0].mxu0
    %v520 = vadd.f32 0.0, %v519
    %v521 = vpop.f32.mrb[0].mxu0
    %522 = vmatprep.mubr.f32.mxu0 0.0
    %523 = vmatmul.mubr.f32.gmra.mrb[0].mxu0 %v445
    %v524 = vpop.f32.mrb[0].mxu0
    %v525 = vadd.f32 0.0, %v524
    %v526 = vpop.f32.mrb[0].mxu0
    %527 = vdwg.mxu0
    %v529 = vsel %vm92, %v70, 0
    %v532 = vsel %vm92, %v71, 0
    %v535 = vsel %vm92, %v86, 0
    %v538 = vsel %vm92, %v87, 0
    %540 = vmatprep.subr.mxu0 0.0
    %541 = vmatpush1.xpose.msra.mxu0 %v535
    %542 = vmatprep.subr.mxu0 0.0
    %543 = vmatpush1.xpose.msra.mxu0 %v538
    %544 = vmatprep.subr.mxu0 0.0
    %545 = vmatpush1.xpose.msra.mxu0 0.0
    %546 = vmatprep.subr.mxu0 0.0
    %547 = vmatpush1.xpose.msra.mxu0 0.0
    %548 = vmatprep.subr.mxu0 0.0
    %549 = vmatpush1.xpose.msra.mxu0 0.0
    %550 = vmatprep.subr.mxu0 0.0
    %551 = vmatpush1.xpose.msra.mxu0 0.0
    %552 = vmatprep.subr.mxu0 0.0
    %553 = vmatpush1.xpose.msra.mxu0 0.0
    %554 = vmatprep.subr.mxu0 0.0
    %555 = vmatpush1.xpose.msra.mxu0 0.0
    %556 = vmatprep.subr.mxu0 0.0
    %557 = vmatpush1.xpose.msra.mxu0 0.0
    %558 = vmatprep.subr.mxu0 0.0
    %559 = vmatpush1.xpose.msra.mxu0 0.0
    %560 = vmatprep.subr.mxu0 0.0
    %561 = vmatpush1.xpose.msra.mxu0 0.0
    %562 = vmatprep.subr.mxu0 0.0
    %563 = vmatpush1.xpose.msra.mxu0 0.0
    %564 = vmatprep.subr.mxu0 0.0
    %565 = vmatpush1.xpose.msra.mxu0 0.0
    %566 = vmatprep.subr.mxu0 0.0
    %567 = vmatpush1.xpose.msra.mxu0 0.0
    %568 = vmatprep.subr.mxu0 0.0
    %569 = vmatpush1.xpose.msra.mxu0 0.0
    %570 = vmatprep.subr.mxu0 0.0
    %571 = vmatpush1.xpose.msra.mxu0 0.0
    %572 = vmatprep.subr.mxu0 0.0
    %573 = vmatpush1.xpose.msra.mxu0 0.0
    %574 = vmatprep.subr.mxu0 0.0
    %575 = vmatpush1.xpose.msra.mxu0 0.0
    %576 = vmatprep.subr.mxu0 0.0
    %577 = vmatpush1.xpose.msra.mxu0 0.0
    %578 = vmatprep.subr.mxu0 0.0
    %579 = vmatpush1.xpose.msra.mxu0 0.0
    %580 = vmatprep.subr.mxu0 0.0
    %581 = vmatpush1.xpose.msra.mxu0 0.0
    %582 = vmatprep.subr.mxu0 0.0
    %583 = vmatpush1.xpose.msra.mxu0 0.0
    %584 = vmatprep.subr.mxu0 0.0
    %585 = vmatpush1.xpose.msra.mxu0 0.0
    %586 = vmatprep.subr.mxu0 0.0
    %587 = vmatpush1.xpose.msra.mxu0 0.0
    %588 = vmatprep.subr.mxu0 0.0
    %589 = vmatpush1.xpose.msra.mxu0 0.0
    %590 = vmatprep.subr.mxu0 0.0
    %591 = vmatpush1.xpose.msra.mxu0 0.0
    %592 = vmatprep.subr.mxu0 0.0
    %593 = vmatpush1.xpose.msra.mxu0 0.0
    %594 = vmatprep.subr.mxu0 0.0
    %595 = vmatpush1.xpose.msra.mxu0 0.0
    %596 = vmatprep.subr.mxu0 0.0
    %597 = vmatpush1.xpose.msra.mxu0 0.0
    %598 = vmatprep.subr.mxu0 0.0
    %599 = vmatpush1.xpose.msra.mxu0 0.0
    %600 = vmatprep.subr.mxu0 0.0
    %601 = vmatpush1.xpose.msra.mxu0 0.0
    %602 = vmatprep.subr.mxu0 0.0
    %603 = vmatpush1.xpose.msra.mxu0 0.0
    %604 = vmatprep.mubr.f32.mxu0 0.0
    %605 = vmatmul.mubr.f32.gmra.mrb[0].mxu0 %v529
    %v606 = vpop.f32.mrb[0].mxu0
    %v607 = vadd.f32 0.0, %v606
    %v608 = vpop.f32.mrb[0].mxu0
    %609 = vmatprep.mubr.f32.mxu0 0.0
    %610 = vmatmul.mubr.f32.gmra.mrb[0].mxu0 %v532
    %v611 = vpop.f32.mrb[0].mxu0
    %v612 = vadd.f32 0.0, %v611
    %v613 = vpop.f32.mrb[0].mxu0
    %614 = vdwg.mxu0
    %v616 = vsel %vm92, %v72, 0
    %v619 = vsel %vm92, %v73, 0
    %v622 = vsel %vm92, %v88, 0
    %v625 = vsel %vm92, %v89, 0
    %627 = vmatprep.subr.mxu0 0.0
    %628 = vmatpush1.xpose.msra.mxu0 %v622
    %629 = vmatprep.subr.mxu0 0.0
    %630 = vmatpush1.xpose.msra.mxu0 %v625
    %631 = vmatprep.subr.mxu0 0.0
    %632 = vmatpush1.xpose.msra.mxu0 0.0
    %633 = vmatprep.subr.mxu0 0.0
    %634 = vmatpush1.xpose.msra.mxu0 0.0
    %635 = vmatprep.subr.mxu0 0.0
    %636 = vmatpush1.xpose.msra.mxu0 0.0
    %637 = vmatprep.subr.mxu0 0.0
    %638 = vmatpush1.xpose.msra.mxu0 0.0
    %639 = vmatprep.subr.mxu0 0.0
    %640 = vmatpush1.xpose.msra.mxu0 0.0
    %641 = vmatprep.subr.mxu0 0.0
    %642 = vmatpush1.xpose.msra.mxu0 0.0
    %643 = vmatprep.subr.mxu0 0.0
    %644 = vmatpush1.xpose.msra.mxu0 0.0
    %645 = vmatprep.subr.mxu0 0.0
    %646 = vmatpush1.xpose.msra.mxu0 0.0
    %647 = vmatprep.subr.mxu0 0.0
    %648 = vmatpush1.xpose.msra.mxu0 0.0
    %649 = vmatprep.subr.mxu0 0.0
    %650 = vmatpush1.xpose.msra.mxu0 0.0
    %651 = vmatprep.subr.mxu0 0.0
    %652 = vmatpush1.xpose.msra.mxu0 0.0
    %653 = vmatprep.subr.mxu0 0.0
    %654 = vmatpush1.xpose.msra.mxu0 0.0
    %655 = vmatprep.subr.mxu0 0.0
    %656 = vmatpush1.xpose.msra.mxu0 0.0
    %657 = vmatprep.subr.mxu0 0.0
    %658 = vmatpush1.xpose.msra.mxu0 0.0
    %659 = vmatprep.subr.mxu0 0.0
    %660 = vmatpush1.xpose.msra.mxu0 0.0
    %661 = vmatprep.subr.mxu0 0.0
    %662 = vmatpush1.xpose.msra.mxu0 0.0
    %663 = vmatprep.subr.mxu0 0.0
    %664 = vmatpush1.xpose.msra.mxu0 0.0
    %665 = vmatprep.subr.mxu0 0.0
    %666 = vmatpush1.xpose.msra.mxu0 0.0
    %667 = vmatprep.subr.mxu0 0.0
    %668 = vmatpush1.xpose.msra.mxu0 0.0
    %669 = vmatprep.subr.mxu0 0.0
    %670 = vmatpush1.xpose.msra.mxu0 0.0
    %671 = vmatprep.subr.mxu0 0.0
    %672 = vmatpush1.xpose.msra.mxu0 0.0
    %673 = vmatprep.subr.mxu0 0.0
    %674 = vmatpush1.xpose.msra.mxu0 0.0
    %675 = vmatprep.subr.mxu0 0.0
    %676 = vmatpush1.xpose.msra.mxu0 0.0
    %677 = vmatprep.subr.mxu0 0.0
    %678 = vmatpush1.xpose.msra.mxu0 0.0
    %679 = vmatprep.subr.mxu0 0.0
    %680 = vmatpush1.xpose.msra.mxu0 0.0
    %681 = vmatprep.subr.mxu0 0.0
    %682 = vmatpush1.xpose.msra.mxu0 0.0
    %683 = vmatprep.subr.mxu0 0.0
    %684 = vmatpush1.xpose.msra.mxu0 0.0
    %685 = vmatprep.subr.mxu0 0.0
    %686 = vmatpush1.xpose.msra.mxu0 0.0
    %687 = vmatprep.subr.mxu0 0.0
    %688 = vmatpush1.xpose.msra.mxu0 0.0
    %689 = vmatprep.subr.mxu0 0.0
    %690 = vmatpush1.xpose.msra.mxu0 0.0
    %691 = vmatprep.mubr.f32.mxu0 0.0
    %692 = vmatmul.mubr.f32.gmra.mrb[0].mxu0 %v616
    %v693 = vpop.f32.mrb[0].mxu0
    %v694 = vadd.f32 0.0, %v693
    %v695 = vpop.f32.mrb[0].mxu0
    %696 = vmatprep.mubr.f32.mxu0 0.0
    %697 = vmatmul.mubr.f32.gmra.mrb[0].mxu0 %v619
    %v698 = vpop.f32.mrb[0].mxu0
    %v699 = vadd.f32 0.0, %v698
    %v700 = vpop.f32.mrb[0].mxu0
    %701 = vdwg.mxu0
    %v703 = vsel %vm92, %v74, 0
    %v706 = vsel %vm92, %v75, 0
    %v709 = vsel %vm92, %v90, 0
    %v712 = vsel %vm92, %v91, 0
    %714 = vmatprep.subr.mxu0 0.0
    %715 = vmatpush1.xpose.msra.mxu0 %v709
    %716 = vmatprep.subr.mxu0 0.0
    %717 = vmatpush1.xpose.msra.mxu0 %v712
    %718 = vmatprep.subr.mxu0 0.0
    %719 = vmatpush1.xpose.msra.mxu0 0.0
    %720 = vmatprep.subr.mxu0 0.0
    %721 = vmatpush1.xpose.msra.mxu0 0.0
    %722 = vmatprep.subr.mxu0 0.0
    %723 = vmatpush1.xpose.msra.mxu0 0.0
    %724 = vmatprep.subr.mxu0 0.0
    %725 = vmatpush1.xpose.msra.mxu0 0.0
    %726 = vmatprep.subr.mxu0 0.0
    %727 = vmatpush1.xpose.msra.mxu0 0.0
    %728 = vmatprep.subr.mxu0 0.0
    %729 = vmatpush1.xpose.msra.mxu0 0.0
    %730 = vmatprep.subr.mxu0 0.0
    %731 = vmatpush1.xpose.msra.mxu0 0.0
    %732 = vmatprep.subr.mxu0 0.0
    %733 = vmatpush1.xpose.msra.mxu0 0.0
    %734 = vmatprep.subr.mxu0 0.0
    %735 = vmatpush1.xpose.msra.mxu0 0.0
    %736 = vmatprep.subr.mxu0 0.0
    %737 = vmatpush1.xpose.msra.mxu0 0.0
    %738 = vmatprep.subr.mxu0 0.0
    %739 = vmatpush1.xpose.msra.mxu0 0.0
    %740 = vmatprep.subr.mxu0 0.0
    %741 = vmatpush1.xpose.msra.mxu0 0.0
    %742 = vmatprep.subr.mxu0 0.0
    %743 = vmatpush1.xpose.msra.mxu0 0.0
    %744 = vmatprep.subr.mxu0 0.0
    %745 = vmatpush1.xpose.msra.mxu0 0.0
    %746 = vmatprep.subr.mxu0 0.0
    %747 = vmatpush1.xpose.msra.mxu0 0.0
    %748 = vmatprep.subr.mxu0 0.0
    %749 = vmatpush1.xpose.msra.mxu0 0.0
    %750 = vmatprep.subr.mxu0 0.0
    %751 = vmatpush1.xpose.msra.mxu0 0.0
    %752 = vmatprep.subr.mxu0 0.0
    %753 = vmatpush1.xpose.msra.mxu0 0.0
    %754 = vmatprep.subr.mxu0 0.0
    %755 = vmatpush1.xpose.msra.mxu0 0.0
    %756 = vmatprep.subr.mxu0 0.0
    %757 = vmatpush1.xpose.msra.mxu0 0.0
    %758 = vmatprep.subr.mxu0 0.0
    %759 = vmatpush1.xpose.msra.mxu0 0.0
    %760 = vmatprep.subr.mxu0 0.0
    %761 = vmatpush1.xpose.msra.mxu0 0.0
    %762 = vmatprep.subr.mxu0 0.0
    %763 = vmatpush1.xpose.msra.mxu0 0.0
    %764 = vmatprep.subr.mxu0 0.0
    %765 = vmatpush1.xpose.msra.mxu0 0.0
    %766 = vmatprep.subr.mxu0 0.0
    %767 = vmatpush1.xpose.msra.mxu0 0.0
    %768 = vmatprep.subr.mxu0 0.0
    %769 = vmatpush1.xpose.msra.mxu0 0.0
    %770 = vmatprep.subr.mxu0 0.0
    %771 = vmatpush1.xpose.msra.mxu0 0.0
    %772 = vmatprep.subr.mxu0 0.0
    %773 = vmatpush1.xpose.msra.mxu0 0.0
    %774 = vmatprep.subr.mxu0 0.0
    %775 = vmatpush1.xpose.msra.mxu0 0.0
    %776 = vmatprep.subr.mxu0 0.0
    %777 = vmatpush1.xpose.msra.mxu0 0.0
    %778 = vmatprep.mubr.f32.mxu0 0.0
    %779 = vmatmul.mubr.f32.gmra.mrb[0].mxu0 %v703
    %v780 = vpop.f32.mrb[0].mxu0
    %v781 = vadd.f32 0.0, %v780
    %v782 = vpop.f32.mrb[0].mxu0
    %783 = vmatprep.mubr.f32.mxu0 0.0
    %784 = vmatmul.mubr.f32.gmra.mrb[0].mxu0 %v706
    %v785 = vpop.f32.mrb[0].mxu0
    %v786 = vadd.f32 0.0, %v785
    %v787 = vpop.f32.mrb[0].mxu0
    %788 = vdwg.mxu0
    %v789 = vld [vmem:[%s2] sm:$0x3]
    %v790 = vld [vmem:[%s2 + $0x2] sm:$0x3]
    %v791 = vld [vmem:[%s2 + $0x4] sm:$0x3]
    %v792 = vld [vmem:[%s2 + $0x6] sm:$0x3]
    %v793 = vld [vmem:[%s2 + $0x8] sm:$0x3]
    %v794 = vld [vmem:[%s2 + $0xa] sm:$0x3]
    %v795 = vld [vmem:[%s2 + $0xc] sm:$0x3]
    %v796 = vld [vmem:[%s2 + $0xe] sm:$0x3]
    %v797 = vld [vmem:[%s2 + $0x10] sm:$0x3]
    %v798 = vld [vmem:[%s2 + $0x12] sm:$0x3]
    %v799 = vld [vmem:[%s2 + $0x14] sm:$0x3]
    %v800 = vld [vmem:[%s2 + $0x16] sm:$0x3]
    %v801 = vld [vmem:[%s2 + $0x18] sm:$0x3]
    %v802 = vld [vmem:[%s2 + $0x1a] sm:$0x3]
    %v803 = vld [vmem:[%s2 + $0x1c] sm:$0x3]
    %v804 = vld [vmem:[%s2 + $0x1e] sm:$0x3]
    %vm805 = vnez %v789
    %vm806 = vnez %v790
    %vm807 = vnez %v791
    %vm808 = vnez %v792
    %vm809 = vnez %v793
    %vm810 = vnez %v794
    %vm811 = vnez %v795
    %vm812 = vnez %v796
    %vm813 = vnez %v797
    %vm814 = vnez %v798
    %vm815 = vnez %v799
    %vm816 = vnez %v800
    %vm817 = vnez %v801
    %vm818 = vnez %v802
    %vm819 = vnez %v803
    %vm820 = vnez %v804
    %v821 = vsel %vm805, 16843009, 0
    %v822 = vsel %vm806, 16843009, 0
    %v823 = vsel %vm807, 16843009, 0
    %v824 = vsel %vm808, 16843009, 0
    %v825 = vsel %vm809, 16843009, 0
    %v826 = vsel %vm810, 16843009, 0
    %v827 = vsel %vm811, 16843009, 0
    %v828 = vsel %vm812, 16843009, 0
    %v829 = vsel %vm813, 16843009, 0
    %v830 = vsel %vm814, 16843009, 0
    %v831 = vsel %vm815, 16843009, 0
    %v832 = vsel %vm816, 16843009, 0
    %v833 = vsel %vm817, 16843009, 0
    %v834 = vsel %vm818, 16843009, 0
    %v835 = vsel %vm819, 16843009, 0
    %v836 = vsel %vm820, 16843009, 0
    %v837 = vunpack.c.0.s8 %v821
    %v838 = vunpack.c.0.s8 %v822
    %v839 = vunpack.c.0.s8 %v823
    %v840 = vunpack.c.0.s8 %v824
    %v841 = vunpack.c.0.s8 %v825
    %v842 = vunpack.c.0.s8 %v826
    %v843 = vunpack.c.0.s8 %v827
    %v844 = vunpack.c.0.s8 %v828
    %v845 = vunpack.c.0.s8 %v829
    %v846 = vunpack.c.0.s8 %v830
    %v847 = vunpack.c.0.s8 %v831
    %v848 = vunpack.c.0.s8 %v832
    %v849 = vunpack.c.0.s8 %v833
    %v850 = vunpack.c.0.s8 %v834
    %v851 = vunpack.c.0.s8 %v835
    %v852 = vunpack.c.0.s8 %v836
    %vm853 = vcmp.ne.s32.totalorder %v837, 0
    %vm854 = vcmp.ne.s32.totalorder %v838, 0
    %vm855 = vcmp.ne.s32.totalorder %v839, 0
    %vm856 = vcmp.ne.s32.totalorder %v840, 0
    %vm857 = vcmp.ne.s32.totalorder %v841, 0
    %vm858 = vcmp.ne.s32.totalorder %v842, 0
    %vm859 = vcmp.ne.s32.totalorder %v843, 0
    %vm860 = vcmp.ne.s32.totalorder %v844, 0
    %vm861 = vcmp.ne.s32.totalorder %v845, 0
    %vm862 = vcmp.ne.s32.totalorder %v846, 0
    %vm863 = vcmp.ne.s32.totalorder %v847, 0
    %vm864 = vcmp.ne.s32.totalorder %v848, 0
    %vm865 = vcmp.ne.s32.totalorder %v849, 0
    %vm866 = vcmp.ne.s32.totalorder %v850, 0
    %vm867 = vcmp.ne.s32.totalorder %v851, 0
    %vm868 = vcmp.ne.s32.totalorder %v852, 0
    %v869 = vsel %vm853, -1e+09, %v172
    %v870 = vsel %vm854, -1e+09, %v177
    %v871 = vsel %vm855, -1e+09, %v259
    %v872 = vsel %vm856, -1e+09, %v264
    %v873 = vsel %vm857, -1e+09, %v346
    %v874 = vsel %vm858, -1e+09, %v351
    %v875 = vsel %vm859, -1e+09, %v433
    %v876 = vsel %vm860, -1e+09, %v438
    %v877 = vsel %vm861, -1e+09, %v520
    %v878 = vsel %vm862, -1e+09, %v525
    %v879 = vsel %vm863, -1e+09, %v607
    %v880 = vsel %vm864, -1e+09, %v612
    %v881 = vsel %vm865, -1e+09, %v694
    %v882 = vsel %vm866, -1e+09, %v699
    %v883 = vsel %vm867, -1e+09, %v781
    %v884 = vsel %vm868, -1e+09, %v786
    %v885 = vcombine.low %v869, %v873
    %v886 = vcombine.high %v869, %v873
    %v888 = vunpack.c.l.s4 1983009808
    %v889 = vunpack.c.0.s8 %v888
    %v890 = vlaneseq
    %v891 = vshrl.u32 %v890, 7
    %v892 = vsub.s32 %v889, %v891
    %v893 = vrot.slane %v885, %v892
    %v895 = vunpack.c.l.s4 1983009808
    %v896 = vunpack.c.0.s8 %v895
    %v897 = vlaneseq
    %v898 = vshrl.u32 %v897, 7
    %v899 = vsub.s32 %v896, %v898
    %v900 = vrot.slane %v886, %v899
    %v901 = vcombine.low %v871, %v875
    %v902 = vcombine.high %v871, %v875
    %v904 = vunpack.c.l.s4 1983009808
    %v905 = vunpack.c.0.s8 %v904
    %v906 = vlaneseq
    %v907 = vshrl.u32 %v906, 7
    %v908 = vsub.s32 %v905, %v907
    %v909 = vrot.slane %v901, %v908
    %v911 = vunpack.c.l.s4 1983009808
    %v912 = vunpack.c.0.s8 %v911
    %v913 = vlaneseq
    %v914 = vshrl.u32 %v913, 7
    %v915 = vsub.s32 %v912, %v914
    %v916 = vrot.slane %v902, %v915
    %v917 = vcombine.low %v877, %v881
    %v918 = vcombine.high %v877, %v881
    %v920 = vunpack.c.l.s4 1983009808
    %v921 = vunpack.c.0.s8 %v920
    %v922 = vlaneseq
    %v923 = vshrl.u32 %v922, 7
    %v924 = vsub.s32 %v921, %v923
    %v925 = vrot.slane %v917, %v924
    %v927 = vunpack.c.l.s4 1983009808
    %v928 = vunpack.c.0.s8 %v927
    %v929 = vlaneseq
    %v930 = vshrl.u32 %v929, 7
    %v931 = vsub.s32 %v928, %v930
    %v932 = vrot.slane %v918, %v931
    %v933 = vcombine.low %v879, %v883
    %v934 = vcombine.high %v879, %v883
    %v936 = vunpack.c.l.s4 1983009808
    %v937 = vunpack.c.0.s8 %v936
    %v938 = vlaneseq
    %v939 = vshrl.u32 %v938, 7
    %v940 = vsub.s32 %v937, %v939
    %v941 = vrot.slane %v933, %v940
    %v943 = vunpack.c.l.s4 1983009808
    %v944 = vunpack.c.0.s8 %v943
    %v945 = vlaneseq
    %v946 = vshrl.u32 %v945, 7
    %v947 = vsub.s32 %v944, %v946
    %v948 = vrot.slane %v934, %v947
    %v949 = vcombine.low %v893, %v909
    %v950 = vcombine.high %v893, %v909
    %v952 = vunpack.c.l.s4 1934713408
    %v953 = vunpack.c.0.s8 %v952
    %v954 = vlaneseq
    %v955 = vshrl.u32 %v954, 7
    %v956 = vsub.s32 %v953, %v955
    %v957 = vrot.slane %v949, %v956
    %v959 = vunpack.c.l.s4 1934713408
    %v960 = vunpack.c.0.s8 %v959
    %v961 = vlaneseq
    %v962 = vshrl.u32 %v961, 7
    %v963 = vsub.s32 %v960, %v962
    %v964 = vrot.slane %v950, %v963
    %v965 = vcombine.low %v900, %v916
    %v966 = vcombine.high %v900, %v916
    %v968 = vunpack.c.l.s4 1934713408
    %v969 = vunpack.c.0.s8 %v968
    %v970 = vlaneseq
    %v971 = vshrl.u32 %v970, 7
    %v972 = vsub.s32 %v969, %v971
    %v973 = vrot.slane %v965, %v972
    %v975 = vunpack.c.l.s4 1934713408
    %v976 = vunpack.c.0.s8 %v975
    %v977 = vlaneseq
    %v978 = vshrl.u32 %v977, 7
    %v979 = vsub.s32 %v976, %v978
    %v980 = vrot.slane %v966, %v979
    %v981 = vcombine.low %v925, %v941
    %v982 = vcombine.high %v925, %v941
    %v984 = vunpack.c.l.s4 1934713408
    %v985 = vunpack.c.0.s8 %v984
    %v986 = vlaneseq
    %v987 = vshrl.u32 %v986, 7
    %v988 = vsub.s32 %v985, %v987
    %v989 = vrot.slane %v981, %v988
    %v991 = vunpack.c.l.s4 1934713408
    %v992 = vunpack.c.0.s8 %v991
    %v993 = vlaneseq
    %v994 = vshrl.u32 %v993, 7
    %v995 = vsub.s32 %v992, %v994
    %v996 = vrot.slane %v982, %v995
    %v997 = vcombine.low %v932, %v948
    %v998 = vcombine.high %v932, %v948
    %v1000 = vunpack.c.l.s4 1934713408
    %v1001 = vunpack.c.0.s8 %v1000
    %v1002 = vlaneseq
    %v1003 = vshrl.u32 %v1002, 7
    %v1004 = vsub.s32 %v1001, %v1003
    %v1005 = vrot.slane %v997, %v1004
    %v1007 = vunpack.c.l.s4 1934713408
    %v1008 = vunpack.c.0.s8 %v1007
    %v1009 = vlaneseq
    %v1010 = vshrl.u32 %v1009, 7
    %v1011 = vsub.s32 %v1008, %v1010
    %v1012 = vrot.slane %v998, %v1011
    %v1013 = vcombine.low %v957, %v989
    %v1014 = vcombine.high %v957, %v989
    %v1015 = vcombine.low %v964, %v996
    %v1016 = vcombine.high %v964, %v996
    %v1017 = vcombine.low %v973, %v1005
    %v1018 = vcombine.high %v973, %v1005
    %v1019 = vcombine.low %v980, %v1012
    %v1020 = vcombine.high %v980, %v1012
    %v1021 = vcombine.low %v870, %v874
    %v1022 = vcombine.high %v870, %v874
    %v1024 = vunpack.c.l.s4 1983009808
    %v1025 = vunpack.c.0.s8 %v1024
    %v1026 = vlaneseq
    %v1027 = vshrl.u32 %v1026, 7
    %v1028 = vsub.s32 %v1025, %v1027
    %v1029 = vrot.slane %v1021, %v1028
    %v1031 = vunpack.c.l.s4 1983009808
    %v1032 = vunpack.c.0.s8 %v1031
    %v1033 = vlaneseq
    %v1034 = vshrl.u32 %v1033, 7
    %v1035 = vsub.s32 %v1032, %v1034
    %v1036 = vrot.slane %v1022, %v1035
    %v1037 = vcombine.low %v872, %v876
    %v1038 = vcombine.high %v872, %v876
    %v1040 = vunpack.c.l.s4 1983009808
    %v1041 = vunpack.c.0.s8 %v1040
    %v1042 = vlaneseq
    %v1043 = vshrl.u32 %v1042, 7
    %v1044 = vsub.s32 %v1041, %v1043
    %v1045 = vrot.slane %v1037, %v1044
    %v1047 = vunpack.c.l.s4 1983009808
    %v1048 = vunpack.c.0.s8 %v1047
    %v1049 = vlaneseq
    %v1050 = vshrl.u32 %v1049, 7
    %v1051 = vsub.s32 %v1048, %v1050
    %v1052 = vrot.slane %v1038, %v1051
    %v1053 = vcombine.low %v878, %v882
    %v1054 = vcombine.high %v878, %v882
    %v1056 = vunpack.c.l.s4 1983009808
    %v1057 = vunpack.c.0.s8 %v1056
    %v1058 = vlaneseq
    %v1059 = vshrl.u32 %v1058, 7
    %v1060 = vsub.s32 %v1057, %v1059
    %v1061 = vrot.slane %v1053, %v1060
    %v1063 = vunpack.c.l.s4 1983009808
    %v1064 = vunpack.c.0.s8 %v1063
    %v1065 = vlaneseq
    %v1066 = vshrl.u32 %v1065, 7
    %v1067 = vsub.s32 %v1064, %v1066
    %v1068 = vrot.slane %v1054, %v1067
    %v1069 = vcombine.low %v880, %v884
    %v1070 = vcombine.high %v880, %v884
    %v1072 = vunpack.c.l.s4 1983009808
    %v1073 = vunpack.c.0.s8 %v1072
    %v1074 = vlaneseq
    %v1075 = vshrl.u32 %v1074, 7
    %v1076 = vsub.s32 %v1073, %v1075
    %v1077 = vrot.slane %v1069, %v1076
    %v1079 = vunpack.c.l.s4 1983009808
    %v1080 = vunpack.c.0.s8 %v1079
    %v1081 = vlaneseq
    %v1082 = vshrl.u32 %v1081, 7
    %v1083 = vsub.s32 %v1080, %v1082
    %v1084 = vrot.slane %v1070, %v1083
    %v1085 = vcombine.low %v1029, %v1045
    %v1086 = vcombine.high %v1029, %v1045
    %v1088 = vunpack.c.l.s4 1934713408
    %v1089 = vunpack.c.0.s8 %v1088
    %v1090 = vlaneseq
    %v1091 = vshrl.u32 %v1090, 7
    %v1092 = vsub.s32 %v1089, %v1091
    %v1093 = vrot.slane %v1085, %v1092
    %v1095 = vunpack.c.l.s4 1934713408
    %v1096 = vunpack.c.0.s8 %v1095
    %v1097 = vlaneseq
    %v1098 = vshrl.u32 %v1097, 7
    %v1099 = vsub.s32 %v1096, %v1098
    %v1100 = vrot.slane %v1086, %v1099
    %v1101 = vcombine.low %v1036, %v1052
    %v1102 = vcombine.high %v1036, %v1052
    %v1104 = vunpack.c.l.s4 1934713408
    %v1105 = vunpack.c.0.s8 %v1104
    %v1106 = vlaneseq
    %v1107 = vshrl.u32 %v1106, 7
    %v1108 = vsub.s32 %v1105, %v1107
    %v1109 = vrot.slane %v1101, %v1108
    %v1111 = vunpack.c.l.s4 1934713408
    %v1112 = vunpack.c.0.s8 %v1111
    %v1113 = vlaneseq
    %v1114 = vshrl.u32 %v1113, 7
    %v1115 = vsub.s32 %v1112, %v1114
    %v1116 = vrot.slane %v1102, %v1115
    %v1117 = vcombine.low %v1061, %v1077
    %v1118 = vcombine.high %v1061, %v1077
    %v1120 = vunpack.c.l.s4 1934713408
    %v1121 = vunpack.c.0.s8 %v1120
    %v1122 = vlaneseq
    %v1123 = vshrl.u32 %v1122, 7
    %v1124 = vsub.s32 %v1121, %v1123
    %v1125 = vrot.slane %v1117, %v1124
    %v1127 = vunpack.c.l.s4 1934713408
    %v1128 = vunpack.c.0.s8 %v1127
    %v1129 = vlaneseq
    %v1130 = vshrl.u32 %v1129, 7
    %v1131 = vsub.s32 %v1128, %v1130
    %v1132 = vrot.slane %v1118, %v1131
    %v1133 = vcombine.low %v1068, %v1084
    %v1134 = vcombine.high %v1068, %v1084
    %v1136 = vunpack.c.l.s4 1934713408
    %v1137 = vunpack.c.0.s8 %v1136
    %v1138 = vlaneseq
    %v1139 = vshrl.u32 %v1138, 7
    %v1140 = vsub.s32 %v1137, %v1139
    %v1141 = vrot.slane %v1133, %v1140
    %v1143 = vunpack.c.l.s4 1934713408
    %v1144 = vunpack.c.0.s8 %v1143
    %v1145 = vlaneseq
    %v1146 = vshrl.u32 %v1145, 7
    %v1147 = vsub.s32 %v1144, %v1146
    %v1148 = vrot.slane %v1134, %v1147
    %v1149 = vcombine.low %v1093, %v1125
    %v1150 = vcombine.high %v1093, %v1125
    %v1151 = vcombine.low %v1100, %v1132
    %v1152 = vcombine.high %v1100, %v1132
    %v1153 = vcombine.low %v1109, %v1141
    %v1154 = vcombine.high %v1109, %v1141
    %v1155 = vcombine.low %v1116, %v1148
    %v1156 = vcombine.high %v1116, %v1148
    %1158 = vrot.lane.b32.xlu0 %v1014, 16
    %v1159 = vpop.permute.xlu0 %1158
    %1162 = vrot.lane.b32.xlu0 %v1015, 32
    %v1163 = vpop.permute.xlu0 %1162
    %1166 = vrot.lane.b32.xlu0 %v1016, 48
    %v1167 = vpop.permute.xlu0 %1166
    %1170 = vrot.lane.b32.xlu0 %v1017, 64
    %v1171 = vpop.permute.xlu0 %1170
    %1174 = vrot.lane.b32.xlu0 %v1018, 80
    %v1175 = vpop.permute.xlu0 %1174
    %1178 = vrot.lane.b32.xlu0 %v1019, 96
    %v1179 = vpop.permute.xlu0 %1178
    %1182 = vrot.lane.b32.xlu0 %v1020, 112
    %v1183 = vpop.permute.xlu0 %1182
    %1186 = vrot.lane.b32.xlu0 %v1150, 16
    %v1187 = vpop.permute.xlu0 %1186
    %1190 = vrot.lane.b32.xlu0 %v1151, 32
    %v1191 = vpop.permute.xlu0 %1190
    %1194 = vrot.lane.b32.xlu0 %v1152, 48
    %v1195 = vpop.permute.xlu0 %1194
    %1198 = vrot.lane.b32.xlu0 %v1153, 64
    %v1199 = vpop.permute.xlu0 %1198
    %1202 = vrot.lane.b32.xlu0 %v1154, 80
    %v1203 = vpop.permute.xlu0 %1202
    %1206 = vrot.lane.b32.xlu0 %v1155, 96
    %v1207 = vpop.permute.xlu0 %1206
    %1210 = vrot.lane.b32.xlu0 %v1156, 112
    %v1211 = vpop.permute.xlu0 %1210
    %v1213 = vsel %vm92, %v1013, %v1159
    %vm1214 = vcmask 261120
    %v1215 = vsel %vm1214, %v1213, %v1163
    %vm1216 = vcmask 392192
    %v1217 = vsel %vm1216, %v1215, %v1167
    %vm1218 = vcmask 523264
    %v1219 = vsel %vm1218, %v1217, %v1171
    %vm1220 = vcmask 654336
    %v1221 = vsel %vm1220, %v1219, %v1175
    %vm1222 = vcmask 785408
    %v1223 = vsel %vm1222, %v1221, %v1179
    %vm1224 = vcmask 916480
    %v1225 = vsel %vm1224, %v1223, %v1183
    %v1226 = vsel %vm92, %v1149, %v1187
    %v1227 = vsel %vm1214, %v1226, %v1191
    %v1228 = vsel %vm1216, %v1227, %v1195
    %v1229 = vsel %vm1218, %v1228, %v1199
    %v1230 = vsel %vm1220, %v1229, %v1203
    %v1231 = vsel %vm1222, %v1230, %v1207
    %v1232 = vsel %vm1224, %v1231, %v1211
    %1233 = vst [vmem:[%s3] sm:$0xff] %v1225
    %1234 = vst [vmem:[%s3 + $0x8] sm:$0xff] %v1232
    // Predicated region
    $region22: #{_lambda_.1} parent=1 // pred_check
      _
    $region23: #{_lambda_.1} parent=1 // pred_check_branch
      %1236 = sbr.rel (0) target = $region25
    $region24: #{_lambda_.1} parent=1 // pred_region
      _
    $region25: #{_lambda_.1} parent=1 // pred_fallthru
      _
    // Predicated region
    $region26: #{_lambda_.1} parent=1 // pred_check
      _
    $region27: #{_lambda_.1} parent=1 // pred_check_branch
      %1238 = sbr.rel (0) target = $region29
    $region28: #{_lambda_.1} parent=1 // pred_region
      _
    $region29: #{_lambda_.1} parent=1 // pred_fallthru
      _
    %1239 = vsyncpa [#allocation3], 1
    %1240 = vsyncpa [#allocation5], 1

</llo_original>
